<compile_context>
chip_gen: v7x
topology: tpu7x:2x2x1
jax: 0.10.0
libtpu: 0.0.40
codegen_flags: <defaults>
</compile_context>

<pallas_src>
import jax
import jax.numpy as jnp
from jax.experimental import pallas as pl
from jax.experimental.pallas import tpu as pltpu


def _relu6_kernel(x_ref, o_ref):
    x = x_ref[...]
    # clamp(x, 0, 6); weak-typed scalars preserve the input dtype.
    o_ref[...] = jnp.minimum(jnp.maximum(x, 0), 6)


def _choose_layout(n, itemsize):
    # Sublane packing multiple: 8 for 32-bit, 16 for 16-bit, 32 for 8-bit.
    sublane = max(8, 32 // itemsize)
    # Prefer the widest lane-dense slab that avoids padding entirely.
    for lane in (1024, 512, 256, 128):
        if n % (sublane * lane) == 0:
            return sublane, lane, False
    return sublane, 512, True  # fallback: pad to a multiple of sublane*lane


def relu6_pallas(x, *, max_block_bytes=8 * 1024 * 1024):
    """ReLU6 = min(max(x, 0), 6), elementwise, via a Pallas TPU kernel."""
    orig_shape = x.shape
    dtype = x.dtype
    n = x.size
    itemsize = jnp.dtype(dtype).itemsize

    sublane, lane, needs_pad = _choose_layout(n, itemsize)
    chunk = sublane * lane

    if needs_pad:
        total = pl.cdiv(n, chunk) * chunk
        x_flat = jnp.pad(jnp.ravel(x), (0, total - n))  # relu6(0) == 0, safe
    else:
        total = n
        x_flat = jnp.reshape(x, (n,))  # free in XLA

    rows = total // lane
    x2d = x_flat.reshape(rows, lane)

    # Largest block-row count that (a) is a multiple of `sublane`, (b) divides
    # `rows` exactly, and (c) keeps the block under max_block_bytes (~8 MiB:
    # safe on v7x's 64 MiB VMEM with double-buffered in+out, roofline on all
    # generations). Static Python loop at trace time, cheap.
    max_rows = max(sublane, (max_block_bytes // (lane * itemsize)) // sublane * sublane)
    block_rows = sublane
    cand = sublane
    limit = min(rows, max_rows)
    while cand <= limit:
        if rows % cand == 0:
            block_rows = cand
        cand += sublane

    grid = (rows // block_rows,)
    block_bytes = block_rows * lane * itemsize
    # Budget: (1 in + 1 out) x 2 double-buffers x block_bytes, plus headroom.
    vmem_limit = int(min(100 * 1024 * 1024, max(32 * 1024 * 1024, 6 * block_bytes)))

    out2d = pl.pallas_call(
        _relu6_kernel,
        out_shape=jax.ShapeDtypeStruct((rows, lane), dtype),
        grid_spec=pltpu.PrefetchScalarGridSpec(
            num_scalar_prefetch=0,
            grid=grid,
            in_specs=[pl.BlockSpec((block_rows, lane), lambda i: (i, 0))],
            out_specs=pl.BlockSpec((block_rows, lane), lambda i: (i, 0)),
        ),
        compiler_params=pltpu.CompilerParams(
            dimension_semantics=("parallel",),  # lets v7x shard the grid over 2 TCs
            vmem_limit_bytes=vmem_limit,
        ),
    )(x2d)

    if needs_pad:
        return out2d.reshape(-1)[:n].reshape(orig_shape)
    return out2d.reshape(orig_shape)


if __name__ == "__main__":
    key = jax.random.PRNGKey(0)
    # Small NCHW input consistent with the module's elementwise forward.
    x = jax.random.normal(key, (2, 4, 16, 16), dtype=jnp.float32) * 5.0

    out = relu6_pallas(x)
    jax.block_until_ready(out)

    # Sanity check against pure-JAX reference.
    ref = jnp.clip(x, 0.0, 6.0)
    assert out.shape == x.shape and out.dtype == x.dtype
    assert jnp.allclose(out, ref), "mismatch vs reference ReLU6"

    print("KERNEL_OK")
</pallas_src>

<mosaic_0001>
module attributes {stable_mosaic.version = 11 : i64} {
  func.func @_relu6_kernel(%arg0: i32, %arg1: memref<8x256xf32, #tpu.memory_space<vmem>>, %arg2: memref<8x256xf32, #tpu.memory_space<vmem>>) attributes {dimension_semantics = [#tpu.dimension_semantics<parallel>], iteration_bounds = array<i64: 1>, scalar_prefetch = 0 : i64, scratch_operands = 0 : i64, tpu.core_type = #tpu.core_type<tc>, window_params = [{transform_indices = @transform_0, window_bounds = array<i64: 8, 256>}, {transform_indices = @transform_1, window_bounds = array<i64: 8, 256>}]} {
    %c0 = arith.constant 0 : index
    %c0_0 = arith.constant 0 : index
    %0 = vector.load %arg1[%c0, %c0_0] : memref<8x256xf32, #tpu.memory_space<vmem>>, vector<8x256xf32>
    %cst = arith.constant 0.000000e+00 : f32
    %1 = vector.broadcast %cst : f32 to vector<8x256xf32>
    %2 = arith.maximumf %0, %1 : vector<8x256xf32>
    %cst_1 = arith.constant 6.000000e+00 : f32
    %3 = vector.broadcast %cst_1 : f32 to vector<8x256xf32>
    %4 = arith.minimumf %2, %3 : vector<8x256xf32>
    %c0_2 = arith.constant 0 : index
    %c0_3 = arith.constant 0 : index
    %5 = vector.load %arg2[%c0_2, %c0_3] : memref<8x256xf32, #tpu.memory_space<vmem>>, vector<8x256xf32>
    tpu.vector_store %arg2[%c0_2, %c0_3], %4 {strides = array<i32>} : memref<8x256xf32, #tpu.memory_space<vmem>>, vector<8x256xf32>,
    return
  }
  func.func @transform_0(%arg0: i32) -> (i32, i32) {
    %c0_i32 = arith.constant 0 : i32
    %c0_i32_0 = arith.constant 0 : i32
    return %arg0, %c0_i32 : i32, i32
  }
  func.func @transform_1(%arg0: i32) -> (i32, i32) {
    %c0_i32 = arith.constant 0 : i32
    %c0_i32_0 = arith.constant 0 : i32
    return %arg0, %c0_i32 : i32, i32
  }
}

</mosaic_0001>

<llo_original>
// kernel: tpu_custom_call.1
$region0: #{tpu_custom_call.1}
  #allocation0 [shape = 'u32[]', space=smem, size = 0x4, offset = 0x4, fixed_abs, tag = 'smem constant byte address 0x4 - core index']
  #allocation1 [shape = 'u32[144,128]{1,0:T(1,128)}', space=vmem, size = 0x12000, scoped, tag = 'internal scratch']
  %s0 = inlined_call_operand.hbm [shape: f32[8,256], index: 0, kind: input, shape index: {}]
  %s1 = inlined_call_operand.hbm [shape: f32[8,256], index: 1, kind: output, shape index: {}]
  %s2 = sld [smem:[#allocation0]]
  $region18: #{tpu_custom_call.1} parent=0
    _
  %s4 = ssub.s32 1, %s2
  %s5 = scalar_select 0, %s4, %s2
  $region1: #{tpu_custom_call.1} parent=0
    #allocation2 [shape = 'u8[8192]{0}', space=vmem, size = 0x2000, scoped, tag = 'input window, operand 0, single buffered']
    #allocation3 [shape = 's32[1]{0}', space=sflag, size = 0x4, scoped, tag = 'scoped memory for tpu_custom_call.1']
    #allocation4 [shape = 's32[1]{0}', space=sflag, size = 0x4, scoped, tag = 'scoped memory for tpu_custom_call.1']
    #allocation5 [shape = 'u8[8192]{0}', space=vmem, size = 0x2000, scoped, tag = 'output window, operand 0, single buffered']
    %6 = vsyncpa [#allocation3], 0
    %7 = vsyncpa [#allocation4], 0
    // Predicated region
    $region2: #{tpu_custom_call.1} parent=1 // pred_check
      _
    $region3: #{tpu_custom_call.1} parent=1 // pred_check_branch
      %9 = sbr.rel (0) target = $region5
    $region4: #{tpu_custom_call.1} parent=1 // pred_region
      %s11 = ssub.s32 256, 256
      %12 = vsyncadd [#allocation3], %s11
      %s14 = sshll.u32 [#allocation2], 4
      %s15 = int_to_ptr.vmem [resolvable:$true] %s14
      %17 = dma.hbm_to_vmem [thread:$0]  %s0, 256, %s15, [#allocation3]
    $region5: #{tpu_custom_call.1} parent=1 // pred_fallthru
      _
    // Predicated region
    $region6: #{tpu_custom_call.1} parent=1 // pred_check
      _
    $region7: #{tpu_custom_call.1} parent=1 // pred_check_branch
      %19 = sbr.rel (0) target = $region9
    $region8: #{tpu_custom_call.1} parent=1 // pred_region
      %20 = dma.done [#allocation3], 256
    $region9: #{tpu_custom_call.1} parent=1 // pred_fallthru
      _
    %v21 = vld [vmem:[#allocation2] sm:$0xff]
    %v22 = vld [vmem:[#allocation2 + $0x8] sm:$0xff]
    %v23 = vmax.f32 %v21, 0.0
    %v24 = vmax.f32 %v22, 0.0
    %v25 = vmin.f32 %v23, 6.0
    %v26 = vmin.f32 %v24, 6.0
    %27 = vst [vmem:[#allocation5] sm:$0xff] %v25
    %28 = vst [vmem:[#allocation5 + $0x8] sm:$0xff] %v26
    // Predicated region
    $region10: #{tpu_custom_call.1} parent=1 // pred_check
      _
    $region11: #{tpu_custom_call.1} parent=1 // pred_check_branch
      %30 = sbr.rel (0) target = $region13
    $region12: #{tpu_custom_call.1} parent=1 // pred_region
      %s32 = ssub.s32 256, 256
      %33 = vsyncadd [#allocation4], %s32
      %s35 = sshll.u32 [#allocation5], 4
      %s36 = int_to_ptr.vmem [resolvable:$true] %s35
      %38 = dma.vmem_to_hbm [thread:$0]  %s36, 256, %s1, [#allocation4]
    $region13: #{tpu_custom_call.1} parent=1 // pred_fallthru
      _
    // Predicated region
    $region14: #{tpu_custom_call.1} parent=1 // pred_check
      _
    $region15: #{tpu_custom_call.1} parent=1 // pred_check_branch
      %40 = sbr.rel (0) target = $region17
    $region16: #{tpu_custom_call.1} parent=1 // pred_region
      %41 = dma.done [#allocation4], 256
    $region17: #{tpu_custom_call.1} parent=1 // pred_fallthru
      _
    %42 = vsyncpa [#allocation3], 1
    %43 = vsyncpa [#allocation4], 1

</llo_original>
